<compile_context>
chip_gen: v7x
topology: tpu7x:2x2x1
jax: 0.10.0
libtpu: 0.0.40
codegen_flags: <defaults>
</compile_context>

<pallas_src>
import functools

import jax
import jax.numpy as jnp
from jax.experimental import pallas as pl
from jax.experimental.pallas import tpu as pltpu

_MIB = 1024 * 1024


# ----------------------------------------------------------------------------
# Helpers
# ----------------------------------------------------------------------------
def _cdiv(a, b):
    return -(-a // b)


def _round_up(n, m):
    return _cdiv(n, m) * m


def _pad_to(a, shape):
    pads = [(0, s - d) for d, s in zip(a.shape, shape)]
    if any(p[1] for p in pads):
        return jnp.pad(a, pads)
    return a


def _l2_normalize_rows(v):
    # torch F.normalize(v, dim=1): v / max(||v||_2, 1e-12)
    # rsqrt(max(sumsq, 1e-24)) == 1 / max(sqrt(sumsq), 1e-12); rsqrt uses the
    # (otherwise idle) EUP slot instead of a full-precision divide.
    sumsq = jnp.sum(v * v, axis=1, keepdims=True)
    return v * jax.lax.rsqrt(jnp.maximum(sumsq, 1e-24))


def _vmem_capacity_bytes():
    try:
        info = pltpu.get_tpu_info()
        for attr in ("vmem_capacity_bytes", "vmem_size_bytes", "vmem_bytes"):
            cap = getattr(info, attr, None)
            if cap:
                return int(cap)
    except Exception:
        pass
    return 64 * _MIB  # conservative fallback (v7x per-TC VMEM)


def _device_budget():
    """(vmem_limit_bytes, default block_b) tuned per TPU generation."""
    cap = _vmem_capacity_bytes()
    if cap >= 96 * _MIB:                       # v5e / v6e: 128 MiB physical
        return min(100 * _MIB, cap - 16 * _MIB), 512
    # v7x: 64 MiB per TensorCore -> tighter limit, smaller batch tile
    return min(56 * _MIB, cap - 8 * _MIB), 256


def _choose_h_tile(F_pad, H_pad, vmem_limit):
    """Column-tile W1 so its (double-buffered) bf16 block fits a VMEM budget."""
    w1_budget = max(2 * 2 * 128 * 128, int(0.4 * vmem_limit))
    full_bytes = 2 * 2 * F_pad * H_pad          # x2 buffers, bf16
    if full_bytes <= w1_budget:
        return H_pad, 1, H_pad                  # fully resident (common case)
    n = _cdiv(full_bytes, w1_budget)
    th = max(128, _round_up(_cdiv(H_pad, n), 128))
    grid_h = _cdiv(H_pad, th)
    return th, grid_h, grid_h * th


def _stage_vmem_bytes(bb, F_pad, th, H_pad, C_pad, feat_bytes):
    """Rough per-stage VMEM footprint (2x buffering assumed everywhere)."""
    s1 = (2 * bb * F_pad * 4                    # x tile (f32)
          + 2 * bb * F_pad * feat_bytes         # feat out
          + 2 * bb * th * 2                     # h out (bf16)
          + 2 * 2 * F_pad * th                  # W1 block (bf16)
          + 4 * 4 * th)                         # b1 + stats
    s2 = (2 * bb * H_pad * 2                    # h in (bf16)
          + 2 * 2 * H_pad * C_pad               # W2 (bf16)
          + 2 * 2 * bb * C_pad * 4              # hid + code out
          + 4 * 4 * (2 * H_pad + C_pad))        # scale / shift / b2
    return max(s1, s2)


def _choose_batch_tile(B, F_pad, th, H_pad, C_pad, feat_bytes, vmem_limit,
                       block_b):
    bb = min(block_b, _round_up(B, 8))
    budget = int(0.85 * vmem_limit)
    while bb > 8 and _stage_vmem_bytes(bb, F_pad, th, H_pad, C_pad,
                                       feat_bytes) > budget:
        bb = max(8, _round_up(bb // 2, 8))
    n_tiles = _cdiv(B, bb)
    if B > 8:
        # v7x megacore: keep >= 2 batch tiles (and prefer an even count) so
        # both TensorCores get work; also balances padding for ragged B.
        n_tiles = max(n_tiles, 2)
        if n_tiles % 2 == 1 and _cdiv(B, n_tiles + 1) >= 8:
            n_tiles += 1
        bb = min(bb, _round_up(_cdiv(B, n_tiles), 8))
    grid_b = _cdiv(B, bb)
    return bb, grid_b, grid_b * bb


# ----------------------------------------------------------------------------
# Stage 1: normalize -> Linear1 (+bias), per-tile BN partial statistics
# ----------------------------------------------------------------------------
def _stage1_kernel(x_ref, w1_ref, b1_ref, feat_ref, h_ref, stats_ref, *,
                   batch, block_b, mask_rows):
    x = x_ref[...].astype(jnp.float32)

    # torch module normalizes twice; the second pass is identity up to fp
    # rounding, so it is elided (perf feedback).
    feat = _l2_normalize_rows(x)
    feat_ref[...] = feat.astype(feat_ref.dtype)

    # Linear 1 on the MXU: bf16 operands, f32 accumulation.
    h = jnp.dot(feat.astype(jnp.bfloat16), w1_ref[...],
                preferred_element_type=jnp.float32)
    h = h + b1_ref[...]

    if mask_rows:
        # Padded batch rows would otherwise contribute b1 to the BN stats.
        row = (pl.program_id(0) * block_b
               + jax.lax.broadcasted_iota(jnp.int32, h.shape, 0))
        h = jnp.where(row < batch, h, 0.0)

    # Largest HBM intermediate: store bf16 (halves writeback + stage-2 read).
    h_ref[...] = h.astype(h_ref.dtype)

    # One-pass BN partial statistics in f32 (computed before the downcast).
    stats_ref[0:1, :] = jnp.sum(h, axis=0, keepdims=True)
    stats_ref[1:2, :] = jnp.sum(h * h, axis=0, keepdims=True)


# ----------------------------------------------------------------------------
# Stage 2: folded BatchNorm affine -> ReLU -> Linear2 (+bias) -> tanh
# ----------------------------------------------------------------------------
def _stage2_kernel(h_ref, scale_ref, shift_ref, w2_ref, b2_ref,
                   hid_ref, code_ref, *, alpha):
    # scale = gamma * rsqrt(var + eps), shift = beta - mean * scale
    h = h_ref[...].astype(jnp.float32) * scale_ref[...] + shift_ref[...]
    h = jnp.maximum(h, 0.0)

    hid = jnp.dot(h.astype(jnp.bfloat16), w2_ref[...],
                  preferred_element_type=jnp.float32)
    hid = hid + b2_ref[...]
    hid_ref[...] = hid
    if alpha != 1.0:                 # skip the full-tile multiply when alpha==1
        hid = alpha * hid
    code_ref[...] = jnp.tanh(hid)


# ----------------------------------------------------------------------------
# Wrapper
# ----------------------------------------------------------------------------
def imgnet_rs_forward(x, params, alpha=1.0, block_b=None):
    """Fused ImgNetRS forward. Returns (feat, hid, code)."""
    B, F = x.shape
    H = params["w1"].shape[1]
    C = params["w2"].shape[1]

    vmem_limit, default_bb = _device_budget()
    if block_b is None:
        block_b = default_bb

    # Lane-dense padding (128 multiples), W1 column tiling, batch tiling.
    F_pad = _round_up(F, 128)
    C_pad = _round_up(C, 128)
    th, grid_h, H_pad = _choose_h_tile(F_pad, _round_up(H, 128), vmem_limit)

    feat_dtype = x.dtype
    feat_bytes = jnp.dtype(feat_dtype).itemsize
    bb, grid_b, B_pad = _choose_batch_tile(B, F_pad, th, H_pad, C_pad,
                                           feat_bytes, vmem_limit, block_b)

    f32 = jnp.float32
    bf16 = jnp.bfloat16
    x_p = _pad_to(x.astype(f32), (B_pad, F_pad))
    w1_p = _pad_to(params["w1"], (F_pad, H_pad)).astype(bf16)
    b1_p = _pad_to(params["b1"], (1, H_pad)).astype(f32)
    gamma_p = _pad_to(params["gamma"], (1, H_pad)).astype(f32)
    beta_p = _pad_to(params["beta"], (1, H_pad)).astype(f32)
    w2_p = _pad_to(params["w2"], (H_pad, C_pad)).astype(bf16)
    b2_p = _pad_to(params["b2"], (1, C_pad)).astype(f32)

    cparams1 = pltpu.CompilerParams(
        dimension_semantics=("parallel", "arbitrary"),  # batch tiles sharded
        vmem_limit_bytes=int(vmem_limit))
    cparams2 = pltpu.CompilerParams(
        dimension_semantics=("parallel",),
        vmem_limit_bytes=int(vmem_limit))

    # -------------------- Stage 1 --------------------
    stage1 = functools.partial(_stage1_kernel, batch=B, block_b=bb,
                               mask_rows=(B_pad != B))
    cost1 = pl.CostEstimate(
        flops=int(2 * B_pad * F_pad * H_pad + 4 * B_pad * F_pad * grid_h
                  + 3 * B_pad * H_pad),
        transcendentals=int(B_pad * grid_h),
        bytes_accessed=int(4 * B_pad * F_pad                # x (f32 in)
                           + 2 * F_pad * H_pad              # w1 (bf16)
                           + 4 * H_pad                      # b1
                           + feat_bytes * B_pad * F_pad     # feat out
                           + 2 * B_pad * H_pad              # h out (bf16)
                           + 4 * grid_b * 2 * H_pad),       # stats out
    )
    feat_p, h_p, stats = pl.pallas_call(
        stage1,
        grid=(grid_b, grid_h),
        in_specs=[
            pl.BlockSpec((bb, F_pad), lambda b, j: (b, 0)),
            pl.BlockSpec((F_pad, th), lambda b, j: (0, j)),  # resident / H-tiled W1
            pl.BlockSpec((1, th), lambda b, j: (0, j)),
        ],
        out_specs=(
            pl.BlockSpec((bb, F_pad), lambda b, j: (b, 0)),
            pl.BlockSpec((bb, th), lambda b, j: (b, j)),
            pl.BlockSpec((None, 2, th), lambda b, j: (b, 0, j)),
        ),
        out_shape=(
            jax.ShapeDtypeStruct((B_pad, F_pad), feat_dtype),  # feat
            jax.ShapeDtypeStruct((B_pad, H_pad), bf16),        # h = x@W1 + b1
            jax.ShapeDtypeStruct((grid_b, 2, H_pad), f32),     # per-tile stats
        ),
        compiler_params=cparams1,
        cost_estimate=cost1,
    )(x_p, w1_p, b1_p)

    # Cross-tile BN reduction (training mode, biased variance) on tiny [H] vecs.
    total = jnp.sum(stats[:, 0, :], axis=0)
    total_sq = jnp.sum(stats[:, 1, :], axis=0)
    mean = (total / B)[None, :]
    var = jnp.maximum(total_sq[None, :] / B - mean * mean, 0.0)
    inv_std = jax.lax.rsqrt(var + 1e-5)
    scale = gamma_p * inv_std                  # fold BN into one mul + one add
    shift = beta_p - mean * scale

    # -------------------- Stage 2 --------------------
    stage2 = functools.partial(_stage2_kernel, alpha=float(alpha))
    cost2 = pl.CostEstimate(
        flops=int(2 * B_pad * H_pad * C_pad + 3 * B_pad * H_pad
                  + 2 * B_pad * C_pad),
        transcendentals=int(B_pad * C_pad),
        bytes_accessed=int(2 * B_pad * H_pad              # h in (bf16)
                           + 2 * H_pad * C_pad            # w2 (bf16)
                           + 4 * (2 * H_pad + C_pad)      # scale/shift/b2
                           + 8 * B_pad * C_pad),          # hid + code out
    )
    hid_p, code_p = pl.pallas_call(
        stage2,
        grid=(grid_b,),
        in_specs=[
            pl.BlockSpec((bb, H_pad), lambda b: (b, 0)),
            pl.BlockSpec((1, H_pad), lambda b: (0, 0)),
            pl.BlockSpec((1, H_pad), lambda b: (0, 0)),
            pl.BlockSpec((H_pad, C_pad), lambda b: (0, 0)),   # resident weight
            pl.BlockSpec((1, C_pad), lambda b: (0, 0)),
        ],
        out_specs=(
            pl.BlockSpec((bb, C_pad), lambda b: (b, 0)),
            pl.BlockSpec((bb, C_pad), lambda b: (b, 0)),
        ),
        out_shape=(
            jax.ShapeDtypeStruct((B_pad, C_pad), f32),        # hid
            jax.ShapeDtypeStruct((B_pad, C_pad), f32),        # code
        ),
        compiler_params=cparams2,
        cost_estimate=cost2,
    )(h_p, scale, shift, w2_p, b2_p)

    return feat_p[:B, :F], hid_p[:B, :C], code_p[:B, :C]


# ----------------------------------------------------------------------------
# Reference (pure JAX, bf16 matmul operands to match the MXU path) and init
# ----------------------------------------------------------------------------
def imgnet_rs_reference(x, params, alpha=1.0):
    x = _l2_normalize_rows(x.astype(jnp.float32))
    feat = _l2_normalize_rows(x)
    h = jnp.dot(feat.astype(jnp.bfloat16), params["w1"].astype(jnp.bfloat16),
                preferred_element_type=jnp.float32) + params["b1"]
    mean = jnp.mean(h, axis=0, keepdims=True)
    var = jnp.mean((h - mean) * (h - mean), axis=0, keepdims=True)
    h = (h - mean) * jax.lax.rsqrt(var + 1e-5)
    h = h * params["gamma"] + params["beta"]
    h = jnp.maximum(h, 0.0)
    hid = jnp.dot(h.astype(jnp.bfloat16), params["w2"].astype(jnp.bfloat16),
                  preferred_element_type=jnp.float32) + params["b2"]
    code = jnp.tanh(alpha * hid)
    return feat, hid, code


def init_params(key, img_feat_len, hidden_len, code_len):
    """Deterministic synthetic params (shapes match the torch module)."""
    k1, k2, k3, k4 = jax.random.split(key, 4)
    bound1 = 1.0 / jnp.sqrt(img_feat_len)
    w1 = jax.random.uniform(k1, (img_feat_len, hidden_len), jnp.float32,
                            -bound1, bound1)
    b1 = jax.random.uniform(k2, (1, hidden_len), jnp.float32, -bound1, bound1)
    gamma = jnp.ones((1, hidden_len), jnp.float32)   # BN default weight
    beta = jnp.zeros((1, hidden_len), jnp.float32)   # BN default bias
    bound2 = 1.0 / jnp.sqrt(hidden_len)
    w2 = jax.random.uniform(k3, (hidden_len, code_len), jnp.float32,
                            -bound2, bound2)
    b2 = jax.random.uniform(k4, (1, code_len), jnp.float32, -bound2, bound2)
    return {"w1": w1, "b1": b1, "gamma": gamma, "beta": beta,
            "w2": w2, "b2": b2}


def _check(batch, img_feat_len, hidden_len, code_len, seed):
    key = jax.random.PRNGKey(seed)
    kx, kp = jax.random.split(key)
    x = jax.random.normal(kx, (batch, img_feat_len), jnp.float32)
    params = init_params(kp, img_feat_len, hidden_len, code_len)

    feat, hid, code = imgnet_rs_forward(x, params, alpha=1.0)
    jax.block_until_ready((feat, hid, code))

    assert feat.shape == (batch, img_feat_len)
    assert hid.shape == (batch, code_len)
    assert code.shape == (batch, code_len)

    feat_r, hid_r, code_r = imgnet_rs_reference(x, params, alpha=1.0)
    assert bool(jnp.allclose(feat, feat_r, rtol=1e-4, atol=1e-4))
    # hid/code tolerance covers the bf16 h intermediate (reference keeps f32 h).
    assert bool(jnp.allclose(hid, hid_r, rtol=2e-2, atol=2e-2))
    assert bool(jnp.allclose(code, code_r, rtol=2e-2, atol=2e-2))
    assert bool(jnp.all(jnp.abs(code) <= 1.0))
    assert bool(jnp.all(jnp.isfinite(hid)))


if __name__ == "__main__":
    # Small, single-tile configuration (matches the module's intended sizes).
    _check(batch=8, img_feat_len=32, hidden_len=32, code_len=16, seed=0)
    # Ragged batch: exercises multi-tile grid, padded-row masking, padding.
    _check(batch=44, img_feat_len=96, hidden_len=80, code_len=24, seed=0)
    print("KERNEL_OK")
</pallas_src>

<mosaic_0001>
module attributes {stable_mosaic.version = 11 : i64} {
  func.func @_stage1_kernel(%arg0: i32, %arg1: i32, %arg2: memref<8x128xf32, #tpu.memory_space<vmem>>, %arg3: memref<128x128xbf16, #tpu.memory_space<vmem>>, %arg4: memref<1x128xf32, #tpu.memory_space<vmem>>, %arg5: memref<8x128xf32, #tpu.memory_space<vmem>>, %arg6: memref<8x128xbf16, #tpu.memory_space<vmem>>, %arg7: memref<1x2x128xf32, #tpu.memory_space<vmem>>) attributes {dimension_semantics = [#tpu.dimension_semantics<parallel>, #tpu.dimension_semantics<arbitrary>], iteration_bounds = array<i64: 1, 1>, scalar_prefetch = 0 : i64, scratch_operands = 0 : i64, tpu.core_type = #tpu.core_type<tc>, window_params = [{transform_indices = @transform_0, window_bounds = array<i64: 8, 128>}, {transform_indices = @transform_1, window_bounds = array<i64: 128, 128>}, {transform_indices = @transform_2, window_bounds = array<i64: 1, 128>}, {transform_indices = @transform_3, window_bounds = array<i64: 8, 128>}, {transform_indices = @transform_4, window_bounds = array<i64: 8, 128>}, {transform_indices = @transform_5, window_bounds = array<i64: 1, 2, 128>}]} {
    %c0 = arith.constant 0 : index
    %c0_0 = arith.constant 0 : index
    %0 = vector.load %arg2[%c0, %c0_0] : memref<8x128xf32, #tpu.memory_space<vmem>>, vector<8x128xf32>
    %1 = arith.mulf %0, %0 : vector<8x128xf32>
    %cst = arith.constant dense<0.000000e+00> : vector<8xf32>
    %2 = vector.multi_reduction <add>, %1, %cst [1] : vector<8x128xf32> to vector<8xf32>
    %3 = vector.shape_cast %2 : vector<8xf32> to vector<8x1xf32>
    %cst_1 = arith.constant 1.000000e-24 : f32
    %4 = vector.broadcast %cst_1 : f32 to vector<8x1xf32>
    %5 = arith.maximumf %3, %4 : vector<8x1xf32>
    %6 = math.rsqrt %5 : vector<8x1xf32>
    %7 = vector.broadcast %6 : vector<8x1xf32> to vector<8x128xf32>
    %8 = arith.mulf %0, %7 : vector<8x128xf32>
    %c0_2 = arith.constant 0 : index
    %c0_3 = arith.constant 0 : index
    %9 = vector.load %arg5[%c0_2, %c0_3] : memref<8x128xf32, #tpu.memory_space<vmem>>, vector<8x128xf32>
    tpu.vector_store %arg5[%c0_2, %c0_3], %8 {strides = array<i32>} : memref<8x128xf32, #tpu.memory_space<vmem>>, vector<8x128xf32>,
    %10 = arith.truncf %8 : vector<8x128xf32> to vector<8x128xbf16>
    %c0_4 = arith.constant 0 : index
    %c0_5 = arith.constant 0 : index
    %11 = vector.load %arg3[%c0_4, %c0_5] : memref<128x128xbf16, #tpu.memory_space<vmem>>, vector<128x128xbf16>
    %cst_6 = arith.constant dense<0.000000e+00> : vector<8x128xf32>
    %12 = tpu.matmul %10, %11, %cst_6 {dimension_numbers = #tpu.dot_dimension_numbers<[1], [0], [0], [1], [0, 0, 1, 1], [], []>} : vector<8x128xbf16>, vector<128x128xbf16>, vector<8x128xf32> -> vector<8x128xf32>
    %c0_7 = arith.constant 0 : index
    %c0_8 = arith.constant 0 : index
    %13 = vector.load %arg4[%c0_7, %c0_8] : memref<1x128xf32, #tpu.memory_space<vmem>>, vector<1x128xf32>
    %14 = vector.broadcast %13 : vector<1x128xf32> to vector<8x128xf32>
    %15 = arith.addf %12, %14 : vector<8x128xf32>
    %16 = arith.truncf %15 : vector<8x128xf32> to vector<8x128xbf16>
    %c0_9 = arith.constant 0 : index
    %c0_10 = arith.constant 0 : index
    %17 = vector.load %arg6[%c0_9, %c0_10] : memref<8x128xbf16, #tpu.memory_space<vmem>>, vector<8x128xbf16>
    tpu.vector_store %arg6[%c0_9, %c0_10], %16 {strides = array<i32>} : memref<8x128xbf16, #tpu.memory_space<vmem>>, vector<8x128xbf16>,
    %cst_11 = arith.constant dense<0.000000e+00> : vector<128xf32>
    %18 = vector.multi_reduction <add>, %15, %cst_11 [0] : vector<8x128xf32> to vector<128xf32>
    %19 = vector.shape_cast %18 : vector<128xf32> to vector<1x128xf32>
    %c0_12 = arith.constant 0 : index
    %c0_13 = arith.constant 0 : index
    %c0_14 = arith.constant 0 : index
    %20 = vector.load %arg7[%c0_12, %c0_13, %c0_14] : memref<1x2x128xf32, #tpu.memory_space<vmem>>, vector<1x1x128xf32>
    %21 = vector.shape_cast %20 : vector<1x1x128xf32> to vector<1x128xf32>
    %22 = vector.shape_cast %19 : vector<1x128xf32> to vector<1x1x128xf32>
    tpu.vector_store %arg7[%c0_12, %c0_13, %c0_14], %22 {strides = array<i32>} : memref<1x2x128xf32, #tpu.memory_space<vmem>>, vector<1x1x128xf32>,
    %23 = arith.mulf %15, %15 : vector<8x128xf32>
    %cst_15 = arith.constant dense<0.000000e+00> : vector<128xf32>
    %24 = vector.multi_reduction <add>, %23, %cst_15 [0] : vector<8x128xf32> to vector<128xf32>
    %25 = vector.shape_cast %24 : vector<128xf32> to vector<1x128xf32>
    %c0_16 = arith.constant 0 : index
    %c1 = arith.constant 1 : index
    %c0_17 = arith.constant 0 : index
    %26 = vector.load %arg7[%c0_16, %c1, %c0_17] : memref<1x2x128xf32, #tpu.memory_space<vmem>>, vector<1x1x128xf32>
    %27 = vector.shape_cast %26 : vector<1x1x128xf32> to vector<1x128xf32>
    %28 = vector.shape_cast %25 : vector<1x128xf32> to vector<1x1x128xf32>
    tpu.vector_store %arg7[%c0_16, %c1, %c0_17], %28 {strides = array<i32>} : memref<1x2x128xf32, #tpu.memory_space<vmem>>, vector<1x1x128xf32>,
    return
  }
  func.func @transform_0(%arg0: i32, %arg1: i32) -> (i32, i32) {
    %c0_i32 = arith.constant 0 : i32
    %c0_i32_0 = arith.constant 0 : i32
    return %arg0, %c0_i32 : i32, i32
  }
  func.func @transform_1(%arg0: i32, %arg1: i32) -> (i32, i32) {
    %c0_i32 = arith.constant 0 : i32
    %c0_i32_0 = arith.constant 0 : i32
    return %c0_i32, %arg1 : i32, i32
  }
  func.func @transform_2(%arg0: i32, %arg1: i32) -> (i32, i32) {
    %c0_i32 = arith.constant 0 : i32
    %c0_i32_0 = arith.constant 0 : i32
    return %c0_i32, %arg1 : i32, i32
  }
  func.func @transform_3(%arg0: i32, %arg1: i32) -> (i32, i32) {
    %c0_i32 = arith.constant 0 : i32
    %c0_i32_0 = arith.constant 0 : i32
    return %arg0, %c0_i32 : i32, i32
  }
  func.func @transform_4(%arg0: i32, %arg1: i32) -> (i32, i32) {
    %c0_i32 = arith.constant 0 : i32
    return %arg0, %arg1 : i32, i32
  }
  func.func @transform_5(%arg0: i32, %arg1: i32) -> (i32, i32, i32) {
    %c0_i32 = arith.constant 0 : i32
    %c0_i32_0 = arith.constant 0 : i32
    return %arg0, %c0_i32, %arg1 : i32, i32, i32
  }
}

</mosaic_0001>

<llo_original>
// kernel: tpu_custom_call.1
$region0: #{tpu_custom_call.1}
  #allocation0 [shape = 'u32[]', space=smem, size = 0x4, offset = 0x4, fixed_abs, tag = 'smem constant byte address 0x4 - core index']
  #allocation1 [shape = 'u32[144,128]{1,0:T(1,128)}', space=vmem, size = 0x12000, scoped, tag = 'internal scratch']
  %s0 = inlined_call_operand.hbm [shape: f32[8,128], index: 0, kind: input, shape index: {}]
  %s1 = inlined_call_operand.hbm [shape: bf16[128,128], index: 1, kind: input, shape index: {}]
  %s2 = inlined_call_operand.vmem [shape: f32[1,128], index: 2, kind: input, shape index: {}]
  %s3 = inlined_call_operand.hbm [shape: f32[8,128], index: 3, kind: output, shape index: {0}]
  %s4 = inlined_call_operand.hbm [shape: bf16[8,128], index: 4, kind: output, shape index: {1}]
  %s5 = inlined_call_operand.hbm [shape: f32[1,2,128], index: 5, kind: output, shape index: {2}]
  %6 = xla_tuple %s3, %s4, %s5
  %s7 = sld [smem:[#allocation0]]
  $region46: #{tpu_custom_call.1} parent=0
    _
  %s9 = ssub.s32 1, %s7
  %s10 = scalar_select 0, %s9, %s7
  $region1: #{tpu_custom_call.1} parent=0
    #allocation2 [shape = 'u8[4096]{0}', space=vmem, size = 0x1000, scoped, tag = 'input window, operand 0, single buffered']
    #allocation3 [shape = 's32[1]{0}', space=sflag, size = 0x4, scoped, tag = 'scoped memory for tpu_custom_call.1']
    #allocation4 [shape = 's32[1]{0}', space=sflag, size = 0x4, scoped, tag = 'scoped memory for tpu_custom_call.1']
    #allocation5 [shape = 'u8[32768]{0}', space=vmem, size = 0x8000, scoped, tag = 'input window, operand 1, single buffered']
    #allocation6 [shape = 's32[1]{0}', space=sflag, size = 0x4, scoped, tag = 'scoped memory for tpu_custom_call.1']
    #allocation7 [shape = 'u8[4096]{0}', space=vmem, size = 0x1000, scoped, tag = 'output window, operand 0, single buffered']
    #allocation8 [shape = 'u8[2048]{0}', space=vmem, size = 0x800, scoped, tag = 'output window, operand 1, single buffered']
    #allocation9 [shape = 's32[1]{0}', space=sflag, size = 0x4, scoped, tag = 'scoped memory for tpu_custom_call.1']
    #allocation10 [shape = 'u8[1024]{0}', space=vmem, size = 0x400, scoped, tag = 'output window, operand 2, single buffered']
    %11 = vsyncpa [#allocation3], 0
    %12 = vsyncpa [#allocation6], 0
    %13 = vsyncpa [#allocation4], 0
    %14 = vsyncpa [#allocation9], 0
    // Predicated region
    $region2: #{tpu_custom_call.1} parent=1 // pred_check
      _
    $region3: #{tpu_custom_call.1} parent=1 // pred_check_branch
      %16 = sbr.rel (0) target = $region5
    $region4: #{tpu_custom_call.1} parent=1 // pred_region
      %s18 = ssub.s32 128, 128
      %19 = vsyncadd [#allocation3], %s18
      %s21 = sshll.u32 [#allocation2], 4
      %s22 = int_to_ptr.vmem [resolvable:$true] %s21
      %24 = dma.hbm_to_vmem [thread:$0]  %s0, 128, %s22, [#allocation3]
    $region5: #{tpu_custom_call.1} parent=1 // pred_fallthru
      _
    // Predicated region
    $region6: #{tpu_custom_call.1} parent=1 // pred_check
      _
    $region7: #{tpu_custom_call.1} parent=1 // pred_check_branch
      %26 = sbr.rel (0) target = $region9
    $region8: #{tpu_custom_call.1} parent=1 // pred_region
      %s28 = ssub.s32 1024, 1024
      %29 = vsyncadd [#allocation6], %s28
      %s30 = sshll.u32 [#allocation5], 4
      %s31 = int_to_ptr.vmem [resolvable:$true] %s30
      %36 = dma.hbm_to_vmem [thread:$0]  %s1, 1024, %s31, [#allocation6], 64, 64, 4
    $region9: #{tpu_custom_call.1} parent=1 // pred_fallthru
      _
    // Predicated region
    $region10: #{tpu_custom_call.1} parent=1 // pred_check
      _
    $region11: #{tpu_custom_call.1} parent=1 // pred_check_branch
      %38 = sbr.rel (0) target = $region13
    $region12: #{tpu_custom_call.1} parent=1 // pred_region
      _
    $region13: #{tpu_custom_call.1} parent=1 // pred_fallthru
      _
    // Predicated region
    $region14: #{tpu_custom_call.1} parent=1 // pred_check
      _
    $region15: #{tpu_custom_call.1} parent=1 // pred_check_branch
      %40 = sbr.rel (0) target = $region17
    $region16: #{tpu_custom_call.1} parent=1 // pred_region
      %41 = dma.done [#allocation3], 128
    $region17: #{tpu_custom_call.1} parent=1 // pred_fallthru
      _
    // Predicated region
    $region18: #{tpu_custom_call.1} parent=1 // pred_check
      _
    $region19: #{tpu_custom_call.1} parent=1 // pred_check_branch
      %43 = sbr.rel (0) target = $region21
    $region20: #{tpu_custom_call.1} parent=1 // pred_region
      %44 = dma.done [#allocation6], 1024
    $region21: #{tpu_custom_call.1} parent=1 // pred_fallthru
      _
    %v46 = vld [vmem:[#allocation2] sm:$0xff]
    %v47 = vmul.f32 %v46, %v46
    %48 = vadd.xlane.f32.xlu0 %v47
    %v49 = vpop.xlane.xlu0 %48
    %v50 = vmax.f32 %v49, 1e-24
    %v51 = vrsqrt.pop %v50
    %v52 = vmul.f32 %v46, %v51
    %53 = vst [vmem:[#allocation7] sm:$0xff] %v52
    %v54 = vpack.c.bf16 %v52, %v52
    %v55 = vld [vmem:[#allocation5] sm:$0xf]
    %v56 = vld [vmem:[#allocation5 + $0x4] sm:$0xf]
    %v57 = vld [vmem:[#allocation5 + $0x8] sm:$0xf]
    %v58 = vld [vmem:[#allocation5 + $0xc] sm:$0xf]
    %v59 = vld [vmem:[#allocation5 + $0x10] sm:$0xf]
    %v60 = vld [vmem:[#allocation5 + $0x14] sm:$0xf]
    %v61 = vld [vmem:[#allocation5 + $0x18] sm:$0xf]
    %v62 = vld [vmem:[#allocation5 + $0x1c] sm:$0xf]
    %v63 = vld [vmem:[#allocation5 + $0x20] sm:$0xf]
    %v64 = vld [vmem:[#allocation5 + $0x24] sm:$0xf]
    %v65 = vld [vmem:[#allocation5 + $0x28] sm:$0xf]
    %v66 = vld [vmem:[#allocation5 + $0x2c] sm:$0xf]
    %v67 = vld [vmem:[#allocation5 + $0x30] sm:$0xf]
    %v68 = vld [vmem:[#allocation5 + $0x34] sm:$0xf]
    %v69 = vld [vmem:[#allocation5 + $0x38] sm:$0xf]
    %v70 = vld [vmem:[#allocation5 + $0x3c] sm:$0xf]
    %v71 = vld [vmem:[%s2] sm:$0x1]
    %v73 = vlaneseq
    %v74 = vshrl.u32 %v73, 7
    %v75 = vsub.s32 0, %v74
    %v76 = vrot.slane %v71, %v75
    %v94 = vunpack.c.l.b16 %v55
    %v95 = vunpack.c.l.b16 %v56
    %v96 = vunpack.c.l.b16 %v57
    %v97 = vunpack.c.l.b16 %v58
    %v98 = vunpack.c.l.b16 %v59
    %v99 = vunpack.c.l.b16 %v60
    %v100 = vunpack.c.l.b16 %v61
    %v101 = vunpack.c.l.b16 %v62
    %v102 = vunpack.c.l.b16 %v63
    %v103 = vunpack.c.l.b16 %v64
    %v104 = vunpack.c.l.b16 %v65
    %v105 = vunpack.c.l.b16 %v66
    %v106 = vunpack.c.l.b16 %v67
    %v107 = vunpack.c.l.b16 %v68
    %v108 = vunpack.c.l.b16 %v69
    %v109 = vunpack.c.l.b16 %v70
    %v110 = vpack.c.b16 %v95, %v94
    %v111 = vpack.c.b16 %v97, %v96
    %v112 = vpack.c.b16 %v99, %v98
    %v113 = vpack.c.b16 %v101, %v100
    %v114 = vpack.c.b16 %v103, %v102
    %v115 = vpack.c.b16 %v105, %v104
    %v116 = vpack.c.b16 %v107, %v106
    %v117 = vpack.c.b16 %v109, %v108
    %126 = vmatprep.subr.bf16.mxu0 0
    %127 = vmatpush1.bf16.msra.mxu0 %v110
    %128 = vmatprep.subr.bf16.mxu0 0
    %129 = vmatpush1.bf16.msra.mxu0 %v111
    %130 = vmatprep.subr.bf16.mxu0 0
    %131 = vmatpush1.bf16.msra.mxu0 %v112
    %132 = vmatprep.subr.bf16.mxu0 0
    %133 = vmatpush1.bf16.msra.mxu0 %v113
    %134 = vmatprep.subr.bf16.mxu0 0
    %135 = vmatpush1.bf16.msra.mxu0 %v114
    %136 = vmatprep.subr.bf16.mxu0 0
    %137 = vmatpush1.bf16.msra.mxu0 %v115
    %138 = vmatprep.subr.bf16.mxu0 0
    %139 = vmatpush1.bf16.msra.mxu0 %v116
    %140 = vmatprep.subr.bf16.mxu0 0
    %141 = vmatpush1.bf16.msra.mxu0 %v117
    %142 = vmatprep.subr.bf16.mxu0 0
    %143 = vmatpush1.bf16.msra.mxu0 0
    %144 = vmatprep.subr.bf16.mxu0 0
    %145 = vmatpush1.bf16.msra.mxu0 0
    %146 = vmatprep.subr.bf16.mxu0 0
    %147 = vmatpush1.bf16.msra.mxu0 0
    %148 = vmatprep.subr.bf16.mxu0 0
    %149 = vmatpush1.bf16.msra.mxu0 0
    %150 = vmatprep.subr.bf16.mxu0 0
    %151 = vmatpush1.bf16.msra.mxu0 0
    %152 = vmatprep.subr.bf16.mxu0 0
    %153 = vmatpush1.bf16.msra.mxu0 0
    %154 = vmatprep.subr.bf16.mxu0 0
    %155 = vmatpush1.bf16.msra.mxu0 0
    %156 = vmatprep.subr.bf16.mxu0 0
    %157 = vmatpush1.bf16.msra.mxu0 0
    %158 = vmatprep.mubr.bf16.mxu0 0
    %159 = vmatmul.mubr.bf16.gmra.mrb[0].mxu0 %v54
    %v160 = vpop.f32.mrb[0].mxu0
    %v161 = vadd.f32 %v76, %v160
    %v162 = vpop.f32.mrb[0].mxu0
    %v163 = vpop.f32.mrb[0].mxu0
    %v164 = vpop.f32.mrb[0].mxu0
    %165 = vdwg.mxu0
    %v166 = vpack.c.bf16 %v161, %v161
    %167 = vst [vmem:[#allocation8] sm:$0xf] %v166
    %v168 = vrot.slane %v161, 4
    %v169 = vadd.f32 %v161, %v168
    %v170 = vrot.slane %v169, 2
    %v171 = vadd.f32 %v169, %v170
    %v172 = vrot.slane %v171, 1
    %v173 = vadd.f32 %v171, %v172
    %174 = vst [vmem:[#allocation10] sm:$0x1] %v173
    %v175 = vmul.f32 %v161, %v161
    %v176 = vrot.slane %v175, 4
    %v177 = vadd.f32 %v175, %v176
    %v178 = vrot.slane %v177, 2
    %v179 = vadd.f32 %v177, %v178
    %v180 = vrot.slane %v179, 1
    %v181 = vadd.f32 %v179, %v180
    %182 = vst [vmem:[#allocation10 + $0x1] sm:$0x1] %v181
    // Predicated region
    $region22: #{tpu_custom_call.1} parent=1 // pred_check
      _
    $region23: #{tpu_custom_call.1} parent=1 // pred_check_branch
      %184 = sbr.rel (0) target = $region25
    $region24: #{tpu_custom_call.1} parent=1 // pred_region
      %s186 = ssub.s32 128, 128
      %187 = vsyncadd [#allocation4], %s186
      %s189 = sshll.u32 [#allocation7], 4
      %s190 = int_to_ptr.vmem [resolvable:$true] %s189
      %192 = dma.vmem_to_hbm [thread:$0]  %s190, 128, %s3, [#allocation4]
    $region25: #{tpu_custom_call.1} parent=1 // pred_fallthru
      _
    // Predicated region
    $region26: #{tpu_custom_call.1} parent=1 // pred_check
      _
    $region27: #{tpu_custom_call.1} parent=1 // pred_check_branch
      %194 = sbr.rel (0) target = $region29
    $region28: #{tpu_custom_call.1} parent=1 // pred_region
      %s196 = ssub.s32 64, 64
      %197 = vsyncadd [#allocation9], %s196
      %s199 = sshll.u32 [#allocation8], 4
      %s200 = int_to_ptr.vmem [resolvable:$true] %s199
      %202 = dma.vmem_to_hbm [thread:$0]  %s200, 64, %s4, [#allocation9]
    $region29: #{tpu_custom_call.1} parent=1 // pred_fallthru
      _
    // Predicated region
    $region30: #{tpu_custom_call.1} parent=1 // pred_check
      _
    $region31: #{tpu_custom_call.1} parent=1 // pred_check_branch
      %204 = sbr.rel (0) target = $region33
    $region32: #{tpu_custom_call.1} parent=1 // pred_region
      %s206 = ssub.s32 32, 32
      %207 = vsyncadd [#allocation9], %s206
      %s209 = sshll.u32 [#allocation10], 4
      %s210 = int_to_ptr.vmem [resolvable:$true] %s209
      %212 = dma.vmem_to_hbm [thread:$0]  %s210, 32, %s5, [#allocation9]
    $region33: #{tpu_custom_call.1} parent=1 // pred_fallthru
      _
    // Predicated region
    $region34: #{tpu_custom_call.1} parent=1 // pred_check
      _
    $region35: #{tpu_custom_call.1} parent=1 // pred_check_branch
      %214 = sbr.rel (0) target = $region37
    $region36: #{tpu_custom_call.1} parent=1 // pred_region
      %215 = dma.done [#allocation4], 128
    $region37: #{tpu_custom_call.1} parent=1 // pred_fallthru
      _
    // Predicated region
    $region38: #{tpu_custom_call.1} parent=1 // pred_check
      _
    $region39: #{tpu_custom_call.1} parent=1 // pred_check_branch
      %217 = sbr.rel (0) target = $region41
    $region40: #{tpu_custom_call.1} parent=1 // pred_region
      %218 = dma.done [#allocation9], 64
    $region41: #{tpu_custom_call.1} parent=1 // pred_fallthru
      _
    // Predicated region
    $region42: #{tpu_custom_call.1} parent=1 // pred_check
      _
    $region43: #{tpu_custom_call.1} parent=1 // pred_check_branch
      %220 = sbr.rel (0) target = $region45
    $region44: #{tpu_custom_call.1} parent=1 // pred_region
      %221 = dma.done [#allocation9], 32
    $region45: #{tpu_custom_call.1} parent=1 // pred_fallthru
      _
    %222 = vsyncpa [#allocation3], 1
    %223 = vsyncpa [#allocation6], 1
    %224 = vsyncpa [#allocation4], 1
    %225 = vsyncpa [#allocation9], 1

</llo_original>
